<compile_context>
chip_gen: v7x
topology: tpu7x:2x2x1
jax: 0.10.0
libtpu: 0.0.40
codegen_flags: <defaults>
</compile_context>

<pallas_src>
import functools

import jax
import jax.numpy as jnp
from jax.experimental import pallas as pl
from jax.experimental.pallas import tpu as pltpu


def _vmem_capacity_bytes():
    """Per-core VMEM capacity; conservative 64 MiB fallback (v7x per-TC)."""
    try:
        return int(pltpu.get_tpu_info().vmem_capacity_bytes)
    except Exception:
        return 64 << 20


def _label_smoothing_kernel(x_ref, t_ref, out_ref, acc_ref, *, smoothing,
                            num_classes, tile_n, total_rows, mxu_reduce):
    confidence = 1.0 - smoothing
    p = pl.program_id(0)
    j = pl.program_id(1)

    @pl.when(j == 0)
    def _():
        acc_ref[...] = jnp.zeros_like(acc_ref)

    x = x_ref[...]                                 # (TN, C), native dtype
    t = t_ref[...].astype(jnp.int32)               # (TN, 1)

    # Row max and shift in the native dtype (max exact in bf16; halves VALU
    # pressure for bf16 on v6e/v7x).  One f32 upcast feeds exp / reductions.
    m = jnp.max(x, axis=-1, keepdims=True)
    y = (x - m).astype(jnp.float32)                # (TN, C) f32
    ey = jnp.exp(y)

    col = jax.lax.broadcasted_iota(jnp.int32, y.shape, 1)
    sel = jnp.where(col == t, y, 0.0)              # one nonzero per row: y[t]

    if mxu_reduce:
        # Row sums on the (otherwise idle) MXU; take column 0 of the result.
        ones = jnp.ones((num_classes, 128), jnp.float32)
        sum_ey = jax.lax.dot(ey, ones, preferred_element_type=jnp.float32)[:, :1]
        sum_y = jax.lax.dot(y, ones, preferred_element_type=jnp.float32)[:, :1]
        y_t = jax.lax.dot(sel, ones, preferred_element_type=jnp.float32)[:, :1]
    else:
        sum_ey = jnp.sum(ey, axis=-1, keepdims=True)
        sum_y = jnp.sum(y, axis=-1, keepdims=True)
        y_t = jnp.sum(sel, axis=-1, keepdims=True)

    # loss = lse(y) - smoothing/C * sum(y) - confidence * y[target]
    lse = jnp.log(sum_ey)
    loss = lse - (smoothing / num_classes) * sum_y - confidence * y_t  # (TN,1)

    # Mask rows past the true batch size (partial tail block and any clamped
    # duplicate block from the odd-tile-count part split).
    row0 = (p * pl.num_programs(1) + j) * tile_n
    rows = row0 + jax.lax.broadcasted_iota(jnp.int32, loss.shape, 0)
    loss = jnp.where(rows < total_rows, loss, 0.0)

    acc_ref[...] += jnp.sum(loss, keepdims=True)

    @pl.when(j == pl.num_programs(1) - 1)
    def _():
        out_ref[...] = jnp.broadcast_to(acc_ref[...].reshape(1, 1, 1),
                                        out_ref.shape)


def label_smoothing_loss(x, target, smoothing=0.1, block_bytes=None,
                         mxu_reduce=None):
    """x: (N, C) float logits, target: (N,) int class indices -> scalar f32."""
    n, c = x.shape
    dtype_bytes = jnp.dtype(x.dtype).itemsize
    sub = 8 * max(1, 4 // dtype_bytes)            # sublane multiple (8 f32, 16 bf16)

    capacity = _vmem_capacity_bytes()
    if block_bytes is None:
        # ~8 MiB x-block on v7x (64 MiB/TC), ~16 MiB on v5e/v6e (128 MiB).
        block_bytes = max(4 << 20, capacity // 8)

    if mxu_reduce is None:
        # MXU reduce needs a (C, 128) f32 ones constant resident in VMEM.
        mxu_reduce = c * 128 * 4 <= (4 << 20)

    # Per-row VMEM footprint: double-buffered x block, double-buffered
    # lane-padded (row, 128) int32 target block, ~5 (TN, C) 32-bit temporaries
    # (y, exp(y), iota, select, slop), and the (TN, 128) matmul outputs.
    row_bytes = (2 * c * dtype_bytes
                 + 2 * 128 * 4
                 + 5 * c * 4
                 + 4 * 128 * 4)
    ones_bytes = c * 128 * 4 if mxu_reduce else 0
    budget = int(capacity * 0.7) - ones_bytes - (2 << 20)

    tile_n = min(block_bytes // max(1, c * dtype_bytes),
                 max(1, budget) // row_bytes)
    tile_n = max(sub, (tile_n // sub) * sub)
    if tile_n >= n:
        tile_n = n          # single full block; full-dim blocks are always legal

    num_tiles = pl.cdiv(n, tile_n)
    parts = 2 if num_tiles >= 2 else 1             # shard batch across 2 TCs (v7x)
    steps = pl.cdiv(num_tiles, parts)

    vmem_limit = tile_n * row_bytes + ones_bytes + (2 << 20)
    vmem_limit = int(min(max(vmem_limit, 16 << 20),
                         min(int(capacity * 0.85), 100 << 20)))

    t2d = target.astype(jnp.int32).reshape(n, 1)

    def in_map(p, j):
        # Clamp so an odd tile count with parts=2 re-reads the last block;
        # the kernel's row mask zeroes its contribution.
        return (jnp.minimum(p * steps + j, num_tiles - 1), 0)

    kernel = functools.partial(
        _label_smoothing_kernel,
        smoothing=float(smoothing),
        num_classes=c,
        tile_n=tile_n,
        total_rows=n,
        mxu_reduce=bool(mxu_reduce),
    )

    partial_sums = pl.pallas_call(
        kernel,
        out_shape=jax.ShapeDtypeStruct((parts, 8, 128), jnp.float32),
        grid_spec=pltpu.PrefetchScalarGridSpec(
            num_scalar_prefetch=0,
            grid=(parts, steps),
            in_specs=[
                pl.BlockSpec((tile_n, c), in_map),
                pl.BlockSpec((tile_n, 1), in_map),
            ],
            out_specs=pl.BlockSpec((1, 8, 128), lambda p, j: (p, 0, 0)),
            scratch_shapes=[pltpu.VMEM((1, 1), jnp.float32)],
        ),
        compiler_params=pltpu.CompilerParams(
            dimension_semantics=("parallel", "arbitrary"),
            vmem_limit_bytes=vmem_limit,
        ),
    )(x, t2d)

    # Combine per-part partial sums; batch mean outside the kernel.
    # TODO(synk): per-block partial sums / Kahan accumulation for N >> 1e7.
    total = jnp.sum(partial_sums[:, 0, 0])
    return total / jnp.float32(n)


def _reference(x, target, smoothing=0.1):
    logp = jax.nn.log_softmax(x.astype(jnp.float32), axis=-1)
    nll = -jnp.take_along_axis(logp, target[:, None].astype(jnp.int32), axis=-1)[:, 0]
    smooth = -jnp.mean(logp, axis=-1)
    loss = (1.0 - smoothing) * nll + smoothing * smooth
    return jnp.mean(loss)


if __name__ == "__main__":
    key = jax.random.PRNGKey(0)

    # Test 1: small f32 case (single full block, MXU reduce path).
    kx, kt, key = jax.random.split(key, 3)
    N, C = 8, 32
    x = jax.random.normal(kx, (N, C), dtype=jnp.float32)
    target = jax.random.randint(kt, (N,), 0, C, dtype=jnp.int32)
    out = jax.block_until_ready(label_smoothing_loss(x, target, smoothing=0.1))
    ref = _reference(x, target, smoothing=0.1)
    assert jnp.allclose(out, ref, atol=1e-5, rtol=1e-5), (out, ref)

    # Test 2: N not a multiple of 8, odd tile count -> masked tail block and a
    # clamped duplicate block on the 2-way part split.
    kx, kt, key = jax.random.split(key, 3)
    N2, C2 = 250, 100
    x2 = jax.random.normal(kx, (N2, C2), dtype=jnp.float32)
    t2 = jax.random.randint(kt, (N2,), 0, C2, dtype=jnp.int32)
    out2 = jax.block_until_ready(
        label_smoothing_loss(x2, t2, smoothing=0.1, block_bytes=16 * 1024)
    )
    ref2 = _reference(x2, t2, smoothing=0.1)
    assert jnp.allclose(out2, ref2, atol=1e-5, rtol=1e-5), (out2, ref2)

    # Test 3: bf16 logits streamed in bf16; max/sub run in bf16 so compare
    # against the f32 reference with a bf16-appropriate tolerance.
    kx, kt, key = jax.random.split(key, 3)
    N3, C3 = 64, 128
    x3 = jax.random.normal(kx, (N3, C3), dtype=jnp.bfloat16)
    t3 = jax.random.randint(kt, (N3,), 0, C3, dtype=jnp.int32)
    out3 = jax.block_until_ready(
        label_smoothing_loss(x3, t3, smoothing=0.1, block_bytes=8 * 1024)
    )
    ref3 = _reference(x3, t3, smoothing=0.1)
    assert jnp.allclose(out3, ref3, atol=5e-2, rtol=2e-2), (out3, ref3)

    # Test 4: VPU-reduce fallback path (as used when C is huge).
    kx, kt, key = jax.random.split(key, 3)
    N4, C4 = 40, 64
    x4 = jax.random.normal(kx, (N4, C4), dtype=jnp.float32)
    t4 = jax.random.randint(kt, (N4,), 0, C4, dtype=jnp.int32)
    out4 = jax.block_until_ready(
        label_smoothing_loss(x4, t4, smoothing=0.1, block_bytes=4 * 1024,
                             mxu_reduce=False)
    )
    ref4 = _reference(x4, t4, smoothing=0.1)
    assert jnp.allclose(out4, ref4, atol=1e-5, rtol=1e-5), (out4, ref4)

    print("KERNEL_OK")
</pallas_src>

<mosaic_0001>
module attributes {stable_mosaic.version = 11 : i64} {
  func.func @_label_smoothing_kernel(%arg0: i32, %arg1: i32, %arg2: memref<8x32xf32, #tpu.memory_space<vmem>>, %arg3: memref<8x1xi32, #tpu.memory_space<vmem>>, %arg4: memref<1x8x128xf32, #tpu.memory_space<vmem>>, %arg5: memref<1x1xf32, #tpu.memory_space<vmem>>) attributes {dimension_semantics = [#tpu.dimension_semantics<parallel>, #tpu.dimension_semantics<arbitrary>], iteration_bounds = array<i64: 1, 1>, scalar_prefetch = 0 : i64, scratch_operands = 1 : i64, tpu.core_type = #tpu.core_type<tc>, window_params = [{transform_indices = @transform_0, window_bounds = array<i64: 8, 32>}, {transform_indices = @transform_1, window_bounds = array<i64: 8, 1>}, {transform_indices = @transform_2, window_bounds = array<i64: 1, 8, 128>}]} {
    %c0_i32 = arith.constant 0 : i32
    %0 = arith.cmpi eq, %arg1, %c0_i32 : i32
    %1 = arith.extui %0 : i1 to i32
    %c0_i32_0 = arith.constant 0 : i32
    %2 = arith.cmpi ne, %1, %c0_i32_0 : i32
    scf.if %2 {
      %cst_20 = arith.constant 0.000000e+00 : f32
      %50 = vector.broadcast %cst_20 : f32 to vector<1x1xf32>
      %c0_21 = arith.constant 0 : index
      %c0_22 = arith.constant 0 : index
      %51 = vector.load %arg5[%c0_21, %c0_22] : memref<1x1xf32, #tpu.memory_space<vmem>>, vector<1x1xf32>
      tpu.vector_store %arg5[%c0_21, %c0_22], %50 {strides = array<i32>} : memref<1x1xf32, #tpu.memory_space<vmem>>, vector<1x1xf32>,
    } else {
    }
    %c0 = arith.constant 0 : index
    %c0_1 = arith.constant 0 : index
    %3 = vector.load %arg2[%c0, %c0_1] : memref<8x32xf32, #tpu.memory_space<vmem>>, vector<8x32xf32>
    %c0_2 = arith.constant 0 : index
    %c0_3 = arith.constant 0 : index
    %4 = vector.load %arg3[%c0_2, %c0_3] : memref<8x1xi32, #tpu.memory_space<vmem>>, vector<8x1xi32>
    %cst = arith.constant dense<0xFF800000> : vector<8xf32>
    %5 = vector.multi_reduction <maximumf>, %3, %cst [1] : vector<8x32xf32> to vector<8xf32>
    %6 = vector.shape_cast %5 : vector<8xf32> to vector<8x1xf32>
    %7 = vector.broadcast %6 : vector<8x1xf32> to vector<8x32xf32>
    %8 = arith.subf %3, %7 : vector<8x32xf32>
    %9 = math.exp %8 : vector<8x32xf32>
    %10 = tpu.iota {dimensions = array<i32: 1>} : vector<8x32xi32>
    %11 = vector.broadcast %4 : vector<8x1xi32> to vector<8x32xi32>
    %12 = arith.cmpi eq, %10, %11 : vector<8x32xi32>
    %cst_4 = arith.constant 0.000000e+00 : f32
    %13 = vector.broadcast %cst_4 : f32 to vector<8x32xf32>
    %14 = arith.select %12, %8, %13 : vector<8x32xi1>, vector<8x32xf32>
    %cst_5 = arith.constant 1.000000e+00 : f32
    %15 = vector.broadcast %cst_5 : f32 to vector<32x128xf32>
    %cst_6 = arith.constant dense<0.000000e+00> : vector<8x128xf32>
    %16 = tpu.matmul %9, %15, %cst_6 {dimension_numbers = #tpu.dot_dimension_numbers<[1], [0], [0], [1], [0, 0, 1, 1], [], []>} : vector<8x32xf32>, vector<32x128xf32>, vector<8x128xf32> -> vector<8x128xf32>
    %17 = vector.extract_strided_slice %16 {offsets = [0, 0], sizes = [8, 1], strides = [1, 1]} : vector<8x128xf32> to vector<8x1xf32>
    %cst_7 = arith.constant dense<0.000000e+00> : vector<8x128xf32>
    %18 = tpu.matmul %8, %15, %cst_7 {dimension_numbers = #tpu.dot_dimension_numbers<[1], [0], [0], [1], [0, 0, 1, 1], [], []>} : vector<8x32xf32>, vector<32x128xf32>, vector<8x128xf32> -> vector<8x128xf32>
    %19 = vector.extract_strided_slice %18 {offsets = [0, 0], sizes = [8, 1], strides = [1, 1]} : vector<8x128xf32> to vector<8x1xf32>
    %cst_8 = arith.constant dense<0.000000e+00> : vector<8x128xf32>
    %20 = tpu.matmul %14, %15, %cst_8 {dimension_numbers = #tpu.dot_dimension_numbers<[1], [0], [0], [1], [0, 0, 1, 1], [], []>} : vector<8x32xf32>, vector<32x128xf32>, vector<8x128xf32> -> vector<8x128xf32>
    %21 = vector.extract_strided_slice %20 {offsets = [0, 0], sizes = [8, 1], strides = [1, 1]} : vector<8x128xf32> to vector<8x1xf32>
    %22 = math.log %17 : vector<8x1xf32>
    %cst_9 = arith.constant 3.125000e-03 : f32
    %23 = vector.broadcast %cst_9 : f32 to vector<8x1xf32>
    %24 = arith.mulf %23, %19 : vector<8x1xf32>
    %25 = arith.subf %22, %24 : vector<8x1xf32>
    %cst_10 = arith.constant 0.899999976 : f32
    %26 = vector.broadcast %cst_10 : f32 to vector<8x1xf32>
    %27 = arith.mulf %26, %21 : vector<8x1xf32>
    %28 = arith.subf %25, %27 : vector<8x1xf32>
    %c1_i32 = arith.constant 1 : i32
    %29 = arith.muli %arg0, %c1_i32 : i32
    %30 = arith.addi %29, %arg1 : i32
    %c8_i32 = arith.constant 8 : i32
    %31 = arith.muli %30, %c8_i32 : i32
    %32 = tpu.iota {dimensions = array<i32: 0>} : vector<8x1xi32>
    %33 = vector.broadcast %31 : i32 to vector<8x1xi32>
    %34 = arith.addi %33, %32 : vector<8x1xi32>
    %c8_i32_11 = arith.constant 8 : i32
    %35 = vector.broadcast %c8_i32_11 : i32 to vector<8x1xi32>
    %36 = arith.cmpi slt, %34, %35 : vector<8x1xi32>
    %cst_12 = arith.constant 0.000000e+00 : f32
    %37 = vector.broadcast %cst_12 : f32 to vector<8x1xf32>
    %38 = arith.select %36, %28, %37 : vector<8x1xi1>, vector<8x1xf32>
    %c0_13 = arith.constant 0 : index
    %c0_14 = arith.constant 0 : index
    %39 = vector.load %arg5[%c0_13, %c0_14] : memref<1x1xf32, #tpu.memory_space<vmem>>, vector<1x1xf32>
    %40 = vector.shape_cast %38 : vector<8x1xf32> to vector<1x8x1xf32>
    %cst_15 = arith.constant dense<0.000000e+00> : vector<1xf32>
    %41 = vector.multi_reduction <add>, %40, %cst_15 [1, 2] : vector<1x8x1xf32> to vector<1xf32>
    %42 = vector.shape_cast %41 : vector<1xf32> to vector<1x1x1xf32>
    %43 = vector.extract %42[0, 0, 0] : f32 from vector<1x1x1xf32>
    %44 = vector.broadcast %43 : f32 to vector<1x1xf32>
    %45 = arith.addf %39, %44 : vector<1x1xf32>
    %c0_16 = arith.constant 0 : index
    %c0_17 = arith.constant 0 : index
    %46 = vector.load %arg5[%c0_16, %c0_17] : memref<1x1xf32, #tpu.memory_space<vmem>>, vector<1x1xf32>
    tpu.vector_store %arg5[%c0_16, %c0_17], %45 {strides = array<i32>} : memref<1x1xf32, #tpu.memory_space<vmem>>, vector<1x1xf32>,
    %c0_i32_18 = arith.constant 0 : i32
    %47 = arith.cmpi eq, %arg1, %c0_i32_18 : i32
    %48 = arith.extui %47 : i1 to i32
    %c0_i32_19 = arith.constant 0 : i32
    %49 = arith.cmpi ne, %48, %c0_i32_19 : i32
    scf.if %49 {
      %c0_20 = arith.constant 0 : index
      %c0_21 = arith.constant 0 : index
      %50 = vector.load %arg5[%c0_20, %c0_21] : memref<1x1xf32, #tpu.memory_space<vmem>>, vector<1x1xf32>
      %51 = vector.shape_cast %50 : vector<1x1xf32> to vector<1x1x1xf32>
      %52 = vector.shape_cast %51 : vector<1x1x1xf32> to vector<1x1x1xf32>
      %53 = vector.broadcast %52 : vector<1x1x1xf32> to vector<1x8x128xf32>
      %c0_22 = arith.constant 0 : index
      %c0_23 = arith.constant 0 : index
      %c0_24 = arith.constant 0 : index
      %54 = vector.load %arg4[%c0_22, %c0_23, %c0_24] : memref<1x8x128xf32, #tpu.memory_space<vmem>>, vector<1x8x128xf32>
      tpu.vector_store %arg4[%c0_22, %c0_23, %c0_24], %53 {strides = array<i32>} : memref<1x8x128xf32, #tpu.memory_space<vmem>>, vector<1x8x128xf32>,
    } else {
    }
    return
  }
  func.func @transform_0(%arg0: i32, %arg1: i32) -> (i32, i32) {
    %c1_i32 = arith.constant 1 : i32
    %0 = arith.muli %arg0, %c1_i32 : i32
    %1 = arith.addi %0, %arg1 : i32
    %c0_i32 = arith.constant 0 : i32
    %2 = arith.minsi %1, %c0_i32 : i32
    %c0_i32_0 = arith.constant 0 : i32
    %c0_i32_1 = arith.constant 0 : i32
    return %2, %c0_i32_0 : i32, i32
  }
  func.func @transform_1(%arg0: i32, %arg1: i32) -> (i32, i32) {
    %c1_i32 = arith.constant 1 : i32
    %0 = arith.muli %arg0, %c1_i32 : i32
    %1 = arith.addi %0, %arg1 : i32
    %c0_i32 = arith.constant 0 : i32
    %2 = arith.minsi %1, %c0_i32 : i32
    %c0_i32_0 = arith.constant 0 : i32
    %c0_i32_1 = arith.constant 0 : i32
    return %2, %c0_i32_0 : i32, i32
  }
  func.func @transform_2(%arg0: i32, %arg1: i32) -> (i32, i32, i32) {
    %c0_i32 = arith.constant 0 : i32
    %c0_i32_0 = arith.constant 0 : i32
    %c0_i32_1 = arith.constant 0 : i32
    return %arg0, %c0_i32, %c0_i32_0 : i32, i32, i32
  }
}

</mosaic_0001>

<llo_original>
// kernel: tpu_custom_call.1
$region0: #{tpu_custom_call.1}
  #allocation0 [shape = 'u32[]', space=smem, size = 0x4, offset = 0x4, fixed_abs, tag = 'smem constant byte address 0x4 - core index']
  #allocation1 [shape = 'u32[144,128]{1,0:T(1,128)}', space=vmem, size = 0x12000, scoped, tag = 'internal scratch']
  #allocation2 [shape = 'f32[1,1]{1,0:T(1,128)}', space=vmem, size = 0x200, scoped, tag = 'scratch operand']
  %s0 = inlined_call_operand.vmem [shape: f32[8,32], index: 0, kind: input, shape index: {}]
  %s1 = inlined_call_operand.vmem [shape: s32[8,1], index: 1, kind: input, shape index: {}]
  %s2 = inlined_call_operand.hbm [shape: f32[1,8,128], index: 2, kind: output, shape index: {}]
  %s3 = sld [smem:[#allocation0]]
  $region26: #{tpu_custom_call.1} parent=0
    _
  %s5 = ssub.s32 1, %s3
  %s6 = scalar_select 0, %s5, %s3
  $region1: #{tpu_custom_call.1} parent=0
    #allocation3 [shape = 'u8[4096]{0}', space=vmem, size = 0x1000, scoped, tag = 'output window, operand 0, single buffered']
    #allocation4 [shape = 's32[1]{0}', space=sflag, size = 0x4, scoped, tag = 'scoped memory for tpu_custom_call.1']
    %7 = vsyncpa [#allocation4], 0
    // Predicated region
    $region2: #{tpu_custom_call.1} parent=1 // pred_check
      _
    $region3: #{tpu_custom_call.1} parent=1 // pred_check_branch
      %9 = sbr.rel (0) target = $region5
    $region4: #{tpu_custom_call.1} parent=1 // pred_region
      %s10 = sadd.s32 0, 0
      %p11 = scmp.lt.s32.totalorder %s10, 0
      %s12 = scalar_select %p11, %s10, 0
      %p13 = scmp.lt.s32.totalorder %s12, 0
      %s14 = scalar_select %p13, %s12, 0
      %s15 = smul.addr %s14, 8
      %s16 = scalar_lea.vmem %s0, %s15
      %s17 = sadd.s32 0, 0
      %p18 = scmp.lt.s32.totalorder %s17, 0
      %s19 = scalar_select %p18, %s17, 0
    $region5: #{tpu_custom_call.1} parent=1 // pred_fallthru
      _
    // Predicated region
    $region6: #{tpu_custom_call.1} parent=1 // pred_check
      _
    $region7: #{tpu_custom_call.1} parent=1 // pred_check_branch
      %21 = sbr.rel (0) target = $region9
    $region8: #{tpu_custom_call.1} parent=1 // pred_region
      %s22 = sadd.s32 0, 0
      %p23 = scmp.lt.s32.totalorder %s22, 0
      %s24 = scalar_select %p23, %s22, 0
      %p25 = scmp.lt.s32.totalorder %s24, 0
      %s26 = scalar_select %p25, %s24, 0
      %s27 = smul.addr %s26, 8
      %s28 = scalar_lea.vmem %s1, %s27
      %s29 = sadd.s32 0, 0
      %p30 = scmp.lt.s32.totalorder %s29, 0
      %s31 = scalar_select %p30, %s29, 0
    $region9: #{tpu_custom_call.1} parent=1 // pred_fallthru
      _
    %s32 = sadd.s32 0, 0
    %p33 = scmp.lt.s32.totalorder %s32, 0
    %s34 = scalar_select %p33, %s32, 0
    %p35 = scmp.lt.s32.totalorder %s34, 0
    %s36 = scalar_select %p35, %s34, 0
    %s37 = smul.addr %s36, 8
    %s38 = scalar_lea.vmem %s0, %s37
    %s39 = sadd.s32 0, 0
    %p40 = scmp.lt.s32.totalorder %s39, 0
    %s41 = scalar_select %p40, %s39, 0
    %p42 = scmp.lt.s32.totalorder %s41, 0
    %s43 = scalar_select %p42, %s41, 0
    %s44 = smul.addr %s43, 8
    %s45 = scalar_lea.vmem %s1, %s44
    %s46 = sadd.s32 0, 0
    %p47 = scmp.lt.s32.totalorder %s46, 0
    %s48 = scalar_select %p47, %s46, 0
    %p49 = scmp.lt.s32.totalorder %s48, 0
    %s50 = scalar_select %p49, %s48, 0
    %s51 = smul.addr %s50, 8
    %s52 = scalar_lea.vmem %s0, %s51
    %s53 = sadd.s32 0, 0
    %p54 = scmp.lt.s32.totalorder %s53, 0
    %s55 = scalar_select %p54, %s53, 0
    %s56 = sadd.s32 0, 0
    %p57 = scmp.lt.s32.totalorder %s56, 0
    %s58 = scalar_select %p57, %s56, 0
    %p59 = scmp.lt.s32.totalorder %s58, 0
    %s60 = scalar_select %p59, %s58, 0
    %s61 = smul.addr %s60, 8
    %s62 = scalar_lea.vmem %s1, %s61
    %s63 = sadd.s32 0, 0
    %p64 = scmp.lt.s32.totalorder %s63, 0
    %s65 = scalar_select %p64, %s63, 0
    %p66 = scmp.eq.s32.totalorder 0, 0
    // Predicated region
    $region10: #{tpu_custom_call.1} parent=1 // pred_check
      %p67 = pneg %p66
    $region11: #{tpu_custom_call.1} parent=1 // pred_check_branch
      %69 = sbr.rel (%p67) target = $region13
    $region12: #{tpu_custom_call.1} parent=1 // pred_region
      %vm70 = vcmask 0
      %71 = vst.msk [vmem:[#allocation2] sm:$0x1] %vm70, 0.0
    $region13: #{tpu_custom_call.1} parent=1 // pred_fallthru
      _
    %v72 = vld [vmem:[%s52] sm:$0xff]
    %v73 = vld [vmem:[%s62] sm:$0xff]
    %vm74 = vcmask 261120
    %v75 = vsel %vm74, %v72, -inf
    %76 = vmax.xlane.f32.xlu0 %v75
    %v77 = vpop.xlane.xlu0 %76
    %v78 = vsub.f32 %v72, %v77
    %v79 = vmul.f32 %v78, 1.442695
    %v80 = vpow.pop %v79
    %v81 = vlaneseq
    %v82 = vand.u32 %v81, 127
    %83 = vset.pattern.permute.xlu0 0
    %84 = vperm.xlu0 %83, %v73
    %v85 = vpop.permute.xlu0 %84
    %vm86 = vcmp.eq.s32.totalorder %v82, %v85
    %v87 = vsel %vm86, %v78, 0.0
    %v89 = vsel %vm74, %v80, 0
    %91 = vmatprep.subr.mxu0 0.0
    %92 = vmatpush1.msra.mxu0 1.0
    %93 = vmatprep.subr.mxu0 0.0
    %94 = vmatpush1.msra.mxu0 1.0
    %95 = vmatprep.subr.mxu0 0.0
    %96 = vmatpush1.msra.mxu0 1.0
    %97 = vmatprep.subr.mxu0 0.0
    %98 = vmatpush1.msra.mxu0 1.0
    %99 = vmatprep.subr.mxu0 0.0
    %100 = vmatpush1.msra.mxu0 0.0
    %101 = vmatprep.subr.mxu0 0.0
    %102 = vmatpush1.msra.mxu0 0.0
    %103 = vmatprep.subr.mxu0 0.0
    %104 = vmatpush1.msra.mxu0 0.0
    %105 = vmatprep.subr.mxu0 0.0
    %106 = vmatpush1.msra.mxu0 0.0
    %107 = vmatprep.subr.mxu0 0.0
    %108 = vmatpush1.msra.mxu0 0.0
    %109 = vmatprep.subr.mxu0 0.0
    %110 = vmatpush1.msra.mxu0 0.0
    %111 = vmatprep.subr.mxu0 0.0
    %112 = vmatpush1.msra.mxu0 0.0
    %113 = vmatprep.subr.mxu0 0.0
    %114 = vmatpush1.msra.mxu0 0.0
    %115 = vmatprep.subr.mxu0 0.0
    %116 = vmatpush1.msra.mxu0 0.0
    %117 = vmatprep.subr.mxu0 0.0
    %118 = vmatpush1.msra.mxu0 0.0
    %119 = vmatprep.subr.mxu0 0.0
    %120 = vmatpush1.msra.mxu0 0.0
    %121 = vmatprep.subr.mxu0 0.0
    %122 = vmatpush1.msra.mxu0 0.0
    %123 = vmatprep.subr.mxu0 0.0
    %124 = vmatpush1.msra.mxu0 0.0
    %125 = vmatprep.subr.mxu0 0.0
    %126 = vmatpush1.msra.mxu0 0.0
    %127 = vmatprep.subr.mxu0 0.0
    %128 = vmatpush1.msra.mxu0 0.0
    %129 = vmatprep.subr.mxu0 0.0
    %130 = vmatpush1.msra.mxu0 0.0
    %131 = vmatprep.subr.mxu0 0.0
    %132 = vmatpush1.msra.mxu0 0.0
    %133 = vmatprep.subr.mxu0 0.0
    %134 = vmatpush1.msra.mxu0 0.0
    %135 = vmatprep.subr.mxu0 0.0
    %136 = vmatpush1.msra.mxu0 0.0
    %137 = vmatprep.subr.mxu0 0.0
    %138 = vmatpush1.msra.mxu0 0.0
    %139 = vmatprep.subr.mxu0 0.0
    %140 = vmatpush1.msra.mxu0 0.0
    %141 = vmatprep.subr.mxu0 0.0
    %142 = vmatpush1.msra.mxu0 0.0
    %143 = vmatprep.subr.mxu0 0.0
    %144 = vmatpush1.msra.mxu0 0.0
    %145 = vmatprep.subr.mxu0 0.0
    %146 = vmatpush1.msra.mxu0 0.0
    %147 = vmatprep.subr.mxu0 0.0
    %148 = vmatpush1.msra.mxu0 0.0
    %149 = vmatprep.subr.mxu0 0.0
    %150 = vmatpush1.msra.mxu0 0.0
    %151 = vmatprep.subr.mxu0 0.0
    %152 = vmatpush1.msra.mxu0 0.0
    %153 = vmatprep.subr.mxu0 0.0
    %154 = vmatpush1.msra.mxu0 0.0
    %155 = vmatprep.mubr.f32.mxu0 0.0
    %156 = vmatmul.mubr.f32.gmra.mrb[0].mxu0 %v89
    %v157 = vpop.f32.mrb[0].mxu0
    %v158 = vadd.f32 0.0, %v157
    %v159 = vpop.f32.mrb[0].mxu0
    %160 = vdwg.mxu0
    %v162 = vsel %vm74, %v78, 0
    %164 = vmatprep.subr.mxu0 0.0
    %165 = vmatpush1.msra.mxu0 1.0
    %166 = vmatprep.subr.mxu0 0.0
    %167 = vmatpush1.msra.mxu0 1.0
    %168 = vmatprep.subr.mxu0 0.0
    %169 = vmatpush1.msra.mxu0 1.0
    %170 = vmatprep.subr.mxu0 0.0
    %171 = vmatpush1.msra.mxu0 1.0
    %172 = vmatprep.subr.mxu0 0.0
    %173 = vmatpush1.msra.mxu0 0.0
    %174 = vmatprep.subr.mxu0 0.0
    %175 = vmatpush1.msra.mxu0 0.0
    %176 = vmatprep.subr.mxu0 0.0
    %177 = vmatpush1.msra.mxu0 0.0
    %178 = vmatprep.subr.mxu0 0.0
    %179 = vmatpush1.msra.mxu0 0.0
    %180 = vmatprep.subr.mxu0 0.0
    %181 = vmatpush1.msra.mxu0 0.0
    %182 = vmatprep.subr.mxu0 0.0
    %183 = vmatpush1.msra.mxu0 0.0
    %184 = vmatprep.subr.mxu0 0.0
    %185 = vmatpush1.msra.mxu0 0.0
    %186 = vmatprep.subr.mxu0 0.0
    %187 = vmatpush1.msra.mxu0 0.0
    %188 = vmatprep.subr.mxu0 0.0
    %189 = vmatpush1.msra.mxu0 0.0
    %190 = vmatprep.subr.mxu0 0.0
    %191 = vmatpush1.msra.mxu0 0.0
    %192 = vmatprep.subr.mxu0 0.0
    %193 = vmatpush1.msra.mxu0 0.0
    %194 = vmatprep.subr.mxu0 0.0
    %195 = vmatpush1.msra.mxu0 0.0
    %196 = vmatprep.subr.mxu0 0.0
    %197 = vmatpush1.msra.mxu0 0.0
    %198 = vmatprep.subr.mxu0 0.0
    %199 = vmatpush1.msra.mxu0 0.0
    %200 = vmatprep.subr.mxu0 0.0
    %201 = vmatpush1.msra.mxu0 0.0
    %202 = vmatprep.subr.mxu0 0.0
    %203 = vmatpush1.msra.mxu0 0.0
    %204 = vmatprep.subr.mxu0 0.0
    %205 = vmatpush1.msra.mxu0 0.0
    %206 = vmatprep.subr.mxu0 0.0
    %207 = vmatpush1.msra.mxu0 0.0
    %208 = vmatprep.subr.mxu0 0.0
    %209 = vmatpush1.msra.mxu0 0.0
    %210 = vmatprep.subr.mxu0 0.0
    %211 = vmatpush1.msra.mxu0 0.0
    %212 = vmatprep.subr.mxu0 0.0
    %213 = vmatpush1.msra.mxu0 0.0
    %214 = vmatprep.subr.mxu0 0.0
    %215 = vmatpush1.msra.mxu0 0.0
    %216 = vmatprep.subr.mxu0 0.0
    %217 = vmatpush1.msra.mxu0 0.0
    %218 = vmatprep.subr.mxu0 0.0
    %219 = vmatpush1.msra.mxu0 0.0
    %220 = vmatprep.subr.mxu0 0.0
    %221 = vmatpush1.msra.mxu0 0.0
    %222 = vmatprep.subr.mxu0 0.0
    %223 = vmatpush1.msra.mxu0 0.0
    %224 = vmatprep.subr.mxu0 0.0
    %225 = vmatpush1.msra.mxu0 0.0
    %226 = vmatprep.subr.mxu0 0.0
    %227 = vmatpush1.msra.mxu0 0.0
    %228 = vmatprep.mubr.f32.mxu0 0.0
    %229 = vmatmul.mubr.f32.gmra.mrb[0].mxu0 %v162
    %v230 = vpop.f32.mrb[0].mxu0
    %v231 = vadd.f32 0.0, %v230
    %v232 = vpop.f32.mrb[0].mxu0
    %233 = vdwg.mxu0
    %v235 = vsel %vm74, %v87, 0
    %237 = vmatprep.subr.mxu0 0.0
    %238 = vmatpush1.msra.mxu0 1.0
    %239 = vmatprep.subr.mxu0 0.0
    %240 = vmatpush1.msra.mxu0 1.0
    %241 = vmatprep.subr.mxu0 0.0
    %242 = vmatpush1.msra.mxu0 1.0
    %243 = vmatprep.subr.mxu0 0.0
    %244 = vmatpush1.msra.mxu0 1.0
    %245 = vmatprep.subr.mxu0 0.0
    %246 = vmatpush1.msra.mxu0 0.0
    %247 = vmatprep.subr.mxu0 0.0
    %248 = vmatpush1.msra.mxu0 0.0
    %249 = vmatprep.subr.mxu0 0.0
    %250 = vmatpush1.msra.mxu0 0.0
    %251 = vmatprep.subr.mxu0 0.0
    %252 = vmatpush1.msra.mxu0 0.0
    %253 = vmatprep.subr.mxu0 0.0
    %254 = vmatpush1.msra.mxu0 0.0
    %255 = vmatprep.subr.mxu0 0.0
    %256 = vmatpush1.msra.mxu0 0.0
    %257 = vmatprep.subr.mxu0 0.0
    %258 = vmatpush1.msra.mxu0 0.0
    %259 = vmatprep.subr.mxu0 0.0
    %260 = vmatpush1.msra.mxu0 0.0
    %261 = vmatprep.subr.mxu0 0.0
    %262 = vmatpush1.msra.mxu0 0.0
    %263 = vmatprep.subr.mxu0 0.0
    %264 = vmatpush1.msra.mxu0 0.0
    %265 = vmatprep.subr.mxu0 0.0
    %266 = vmatpush1.msra.mxu0 0.0
    %267 = vmatprep.subr.mxu0 0.0
    %268 = vmatpush1.msra.mxu0 0.0
    %269 = vmatprep.subr.mxu0 0.0
    %270 = vmatpush1.msra.mxu0 0.0
    %271 = vmatprep.subr.mxu0 0.0
    %272 = vmatpush1.msra.mxu0 0.0
    %273 = vmatprep.subr.mxu0 0.0
    %274 = vmatpush1.msra.mxu0 0.0
    %275 = vmatprep.subr.mxu0 0.0
    %276 = vmatpush1.msra.mxu0 0.0
    %277 = vmatprep.subr.mxu0 0.0
    %278 = vmatpush1.msra.mxu0 0.0
    %279 = vmatprep.subr.mxu0 0.0
    %280 = vmatpush1.msra.mxu0 0.0
    %281 = vmatprep.subr.mxu0 0.0
    %282 = vmatpush1.msra.mxu0 0.0
    %283 = vmatprep.subr.mxu0 0.0
    %284 = vmatpush1.msra.mxu0 0.0
    %285 = vmatprep.subr.mxu0 0.0
    %286 = vmatpush1.msra.mxu0 0.0
    %287 = vmatprep.subr.mxu0 0.0
    %288 = vmatpush1.msra.mxu0 0.0
    %289 = vmatprep.subr.mxu0 0.0
    %290 = vmatpush1.msra.mxu0 0.0
    %291 = vmatprep.subr.mxu0 0.0
    %292 = vmatpush1.msra.mxu0 0.0
    %293 = vmatprep.subr.mxu0 0.0
    %294 = vmatpush1.msra.mxu0 0.0
    %295 = vmatprep.subr.mxu0 0.0
    %296 = vmatpush1.msra.mxu0 0.0
    %297 = vmatprep.subr.mxu0 0.0
    %298 = vmatpush1.msra.mxu0 0.0
    %299 = vmatprep.subr.mxu0 0.0
    %300 = vmatpush1.msra.mxu0 0.0
    %301 = vmatprep.mubr.f32.mxu0 0.0
    %302 = vmatmul.mubr.f32.gmra.mrb[0].mxu0 %v235
    %v303 = vpop.f32.mrb[0].mxu0
    %v304 = vadd.f32 0.0, %v303
    %v305 = vpop.f32.mrb[0].mxu0
    %306 = vdwg.mxu0
    %v307 = vlog2.pop %v158
    %v308 = vmul.f32 %v307, 0.6931472
    %v309 = vmul.f32 %v231, 0.003125
    %v310 = vsub.f32 %v308, %v309
    %v311 = vmul.f32 %v304, 0.9
    %v312 = vsub.f32 %v310, %v311
    %s313 = sadd.s32 0, 0
    %s314 = smul.u32 %s313, 8
    %v315 = vlaneseq
    %v316 = vshrl.u32 %v315, 7
    %v317 = vstv %s314
    %v318 = vadd.s32 %v317, %v316
    %vm319 = vcmp.lt.s32.totalorder %v318, 8
    %v320 = vsel %vm319, %v312, 0.0
    %v321 = vld [vmem:[#allocation2] sm:$0x1]
    %vm322 = vcmask 7168
    %v323 = vsel %vm322, %v320, 0.0
    %324 = vadd.xlane.f32.xlu0 %v323
    %v325 = vpop.xlane.xlu0 %324
    %v326 = vrot.slane %v325, 4
    %v327 = vadd.f32 %v325, %v326
    %v328 = vrot.slane %v327, 2
    %v329 = vadd.f32 %v327, %v328
    %v330 = vrot.slane %v329, 1
    %v331 = vadd.f32 %v329, %v330
    %s332 = vtos %v331
    %v333 = vstv %s332
    %v334 = vadd.f32 %v321, %v333
    %vm335 = vcmask 0
    %336 = vst.msk [vmem:[#allocation2] sm:$0x1] %vm335, %v334
    // Predicated region
    $region14: #{tpu_custom_call.1} parent=1 // pred_check
      %p337 = pneg %p66
    $region15: #{tpu_custom_call.1} parent=1 // pred_check_branch
      %339 = sbr.rel (%p337) target = $region17
    $region16: #{tpu_custom_call.1} parent=1 // pred_region
      %v340 = vld [vmem:[#allocation2] sm:$0x1]
      %v342 = vlaneseq
      %v343 = vshrl.u32 %v342, 7
      %v344 = vsub.s32 0, %v343
      %v345 = vrot.slane %v340, %v344
      %346 = vset.pattern.permute.xlu0 0
      %347 = vperm.xlu0 %346, %v345
      %v348 = vpop.permute.xlu0 %347
      %350 = vst [vmem:[#allocation3] sm:$0xff] %v348
    $region17: #{tpu_custom_call.1} parent=1 // pred_fallthru
      _
    // Predicated region
    $region18: #{tpu_custom_call.1} parent=1 // pred_check
      _
    $region19: #{tpu_custom_call.1} parent=1 // pred_check_branch
      %352 = sbr.rel (0) target = $region21
    $region20: #{tpu_custom_call.1} parent=1 // pred_region
      %s354 = ssub.s32 128, 128
      %355 = vsyncadd [#allocation4], %s354
      %s357 = sshll.u32 [#allocation3], 4
      %s358 = int_to_ptr.vmem [resolvable:$true] %s357
      %360 = dma.vmem_to_hbm [thread:$0]  %s358, 128, %s2, [#allocation4]
    $region21: #{tpu_custom_call.1} parent=1 // pred_fallthru
      _
    // Predicated region
    $region22: #{tpu_custom_call.1} parent=1 // pred_check
      _
    $region23: #{tpu_custom_call.1} parent=1 // pred_check_branch
      %362 = sbr.rel (0) target = $region25
    $region24: #{tpu_custom_call.1} parent=1 // pred_region
      %363 = dma.done [#allocation4], 128
    $region25: #{tpu_custom_call.1} parent=1 // pred_fallthru
      _
    %364 = vsyncpa [#allocation4], 1

</llo_original>
